<compile_context>
chip_gen: v7x
topology: tpu7x:2x2x1
jax: 0.10.0
libtpu: 0.0.40
codegen_flags: <defaults>
</compile_context>

<pallas_src>
import functools

import jax
import jax.numpy as jnp
from jax.experimental import pallas as pl
from jax.experimental.pallas import tpu as pltpu

_LANE = 128      # vreg lane width
_SUBLANE = 8     # vreg sublane count (f32)


def _round_up(n, m):
    return ((n + m - 1) // m) * m


def _mlp_fused_kernel(*refs, num_layers, activations, compute_dtype):
    """Fused MLP over one batch tile.

    refs = (x_ref, w0_ref, b0_ref, w1_ref, b1_ref, ..., o_ref)
      x_ref : (B_tile, in_pad0)        VMEM, f32
      wK_ref: (in_padK, out_padK)      VMEM, zero-padded, resident across grid
      bK_ref: (1, out_padK)            VMEM, zero-padded
      o_ref : (B_tile, out_pad_last)   VMEM (lane-dense, 128-wide slab)
    """
    x_ref = refs[0]
    o_ref = refs[-1]
    h = x_ref[...]                                   # f32 activations
    for l in range(num_layers):                      # unrolled at trace time
        w_ref = refs[1 + 2 * l]
        b_ref = refs[2 + 2 * l]
        h = jnp.dot(h.astype(compute_dtype),
                    w_ref[...].astype(compute_dtype),
                    preferred_element_type=jnp.float32)   # MXU, f32 accumulate
        h = h + b_ref[...]                           # (1, Dout) broadcast, f32 on VPU
        act = activations[l]
        if act == "relu":
            h = jnp.maximum(h, 0.0)                  # VPU
        elif act == "sig":
            h = jax.nn.sigmoid(h)                    # exp/recip ride the EUP slot
    o_ref[...] = h.astype(o_ref.dtype)


def mlp_forward_fused(x, weights, biases, activations, *, b_tile=256,
                      compute_dtype=jnp.float32):
    """x: (B, Din) f32.  weights[k]: (in_padK, out_padK) zero-padded; biases[k]: (1, out_padK)."""
    B, Din = x.shape
    in_pad0 = weights[0].shape[0]
    out_pad_last = weights[-1].shape[1]
    num_layers = len(weights)

    # Pick a batch tile (multiple of 8) and pad the batch so the grid divides evenly.
    b_tile = max(_SUBLANE, min(int(b_tile), _round_up(B, _SUBLANE)))
    b_tile = _round_up(b_tile, _SUBLANE)
    B_pad = _round_up(B, b_tile)
    x_pad = jnp.zeros((B_pad, in_pad0), jnp.float32).at[:B, :Din].set(x)

    grid = (B_pad // b_tile,)

    in_specs = [pl.BlockSpec((b_tile, in_pad0), lambda i: (i, 0))]
    for w, b in zip(weights, biases):
        # Constant index_map -> DMA'd once, VMEM-resident for every batch tile.
        in_specs.append(pl.BlockSpec(w.shape, lambda i: (0, 0)))
        in_specs.append(pl.BlockSpec(b.shape, lambda i: (0, 0)))
    out_specs = pl.BlockSpec((b_tile, out_pad_last), lambda i: (i, 0))

    kernel = functools.partial(
        _mlp_fused_kernel,
        num_layers=num_layers,
        activations=tuple(activations),
        compute_dtype=compute_dtype,
    )

    args = [x_pad]
    for w, b in zip(weights, biases):
        args.append(w)
        args.append(b)

    out_pad = pl.pallas_call(
        kernel,
        out_shape=jax.ShapeDtypeStruct((B_pad, out_pad_last), jnp.float32),
        grid_spec=pl.GridSpec(grid=grid, in_specs=in_specs, out_specs=out_specs),
        compiler_params=pltpu.CompilerParams(
            # Batch axis is embarrassingly parallel -> shard across v7x's 2 TCs.
            dimension_semantics=("parallel",),
        ),
    )(*args)
    return out_pad


class MLPPallas:
    """Mirror of the torch MLP: [Linear(n_inputs->n0), act, ..., Linear(last->1)].

    Weights are stored transposed (in, out) and zero-padded to 128-lane multiples
    ONCE at construction; biases are stored as padded (1, out_pad) rows.
    """

    def __init__(self, n_inputs, n_nodes, activation="relu",
                 key=jax.random.PRNGKey(0), b_tile=256,
                 compute_dtype=jnp.float32):
        self.activation = activation
        self.b_tile = b_tile
        self.compute_dtype = compute_dtype

        dims = [n_inputs] + list(n_nodes) + [1]
        self.acts = [activation] * len(n_nodes) + [None]   # final Linear has no act
        self.raw = []       # unpadded (W, b) for reference / export
        self.weights = []   # padded (in_pad, out_pad)
        self.biases = []    # padded (1, out_pad)

        keys = jax.random.split(key, len(dims) - 1)
        for li in range(len(dims) - 1):
            fan_in, fan_out = dims[li], dims[li + 1]
            wk, bk = jax.random.split(keys[li])
            bound = 1.0 / float(fan_in) ** 0.5
            # torch Linear default init: U(-1/sqrt(fan_in), 1/sqrt(fan_in))
            W = jax.random.uniform(wk, (fan_in, fan_out), jnp.float32, -bound, bound)
            b = jax.random.uniform(bk, (fan_out,), jnp.float32, -bound, bound)
            self.raw.append((W, b))

            in_pad = _round_up(fan_in, _LANE)
            out_pad = _round_up(fan_out, _LANE)
            Wp = jnp.zeros((in_pad, out_pad), jnp.float32).at[:fan_in, :fan_out].set(W)
            bp = jnp.zeros((1, out_pad), jnp.float32).at[0, :fan_out].set(b)
            self.weights.append(Wp)
            self.biases.append(bp)

    def forward(self, x):
        B = x.shape[0]
        out_pad = mlp_forward_fused(
            x, self.weights, self.biases, self.acts,
            b_tile=self.b_tile, compute_dtype=self.compute_dtype)
        # Lane-dense (B_pad, 128) slab -> real (B, 1) output.
        return out_pad[:B, :1]


if __name__ == "__main__":
    # Small shapes consistent with the module's forward: X is (batch, n_inputs).
    # b_tile=32 with batch=64 gives a 2-step batch grid to exercise tiling +
    # VMEM-resident weights across grid steps.
    batch, n_inputs = 64, 32
    n_nodes = [64, 32]

    key = jax.random.PRNGKey(0)
    xkey, pkey = jax.random.split(key)
    x = jax.random.normal(xkey, (batch, n_inputs), jnp.float32)

    model = MLPPallas(n_inputs, n_nodes, activation="relu", key=pkey, b_tile=32)
    out = jax.block_until_ready(model.forward(x))

    # Pure-JAX reference on the same (unpadded) params.
    ref = x
    for (W, b), act in zip(model.raw, model.acts):
        ref = jnp.dot(ref, W, precision=jax.lax.Precision.HIGHEST) + b
        if act == "relu":
            ref = jnp.maximum(ref, 0.0)
        elif act == "sig":
            ref = jax.nn.sigmoid(ref)

    assert out.shape == (batch, 1)
    assert jnp.allclose(out, ref, atol=1e-5, rtol=1e-5)

    # TODO(synk): calc_loss (focal / weighted BCE) and early_stop are training
    # utilities, not part of forward; not kernelized.
    print("KERNEL_OK")
</pallas_src>

<mosaic_0001>
module attributes {stable_mosaic.version = 11 : i64} {
  func.func @_mlp_fused_kernel(%arg0: i32, %arg1: memref<32x128xf32, #tpu.memory_space<vmem>>, %arg2: memref<128x128xf32, #tpu.memory_space<vmem>>, %arg3: memref<1x128xf32, #tpu.memory_space<vmem>>, %arg4: memref<128x128xf32, #tpu.memory_space<vmem>>, %arg5: memref<1x128xf32, #tpu.memory_space<vmem>>, %arg6: memref<128x128xf32, #tpu.memory_space<vmem>>, %arg7: memref<1x128xf32, #tpu.memory_space<vmem>>, %arg8: memref<32x128xf32, #tpu.memory_space<vmem>>) attributes {dimension_semantics = [#tpu.dimension_semantics<parallel>], iteration_bounds = array<i64: 2>, scalar_prefetch = 0 : i64, scratch_operands = 0 : i64, tpu.core_type = #tpu.core_type<tc>, window_params = [{transform_indices = @transform_0, window_bounds = array<i64: 32, 128>}, {pipeline_mode = #tpu.pipeline_mode<synchronous>, transform_indices = @transform_1, window_bounds = array<i64: 128, 128>}, {pipeline_mode = #tpu.pipeline_mode<synchronous>, transform_indices = @transform_2, window_bounds = array<i64: 1, 128>}, {pipeline_mode = #tpu.pipeline_mode<synchronous>, transform_indices = @transform_3, window_bounds = array<i64: 128, 128>}, {pipeline_mode = #tpu.pipeline_mode<synchronous>, transform_indices = @transform_4, window_bounds = array<i64: 1, 128>}, {pipeline_mode = #tpu.pipeline_mode<synchronous>, transform_indices = @transform_5, window_bounds = array<i64: 128, 128>}, {pipeline_mode = #tpu.pipeline_mode<synchronous>, transform_indices = @transform_6, window_bounds = array<i64: 1, 128>}, {transform_indices = @transform_7, window_bounds = array<i64: 32, 128>}]} {
    %c0 = arith.constant 0 : index
    %c0_0 = arith.constant 0 : index
    %0 = vector.load %arg1[%c0, %c0_0] : memref<32x128xf32, #tpu.memory_space<vmem>>, vector<32x128xf32>
    %c0_1 = arith.constant 0 : index
    %c0_2 = arith.constant 0 : index
    %1 = vector.load %arg2[%c0_1, %c0_2] : memref<128x128xf32, #tpu.memory_space<vmem>>, vector<128x128xf32>
    %cst = arith.constant dense<0.000000e+00> : vector<32x128xf32>
    %2 = tpu.matmul %0, %1, %cst {dimension_numbers = #tpu.dot_dimension_numbers<[1], [0], [0], [1], [0, 0, 1, 1], [], []>} : vector<32x128xf32>, vector<128x128xf32>, vector<32x128xf32> -> vector<32x128xf32>
    %c0_3 = arith.constant 0 : index
    %c0_4 = arith.constant 0 : index
    %3 = vector.load %arg3[%c0_3, %c0_4] : memref<1x128xf32, #tpu.memory_space<vmem>>, vector<1x128xf32>
    %4 = vector.broadcast %3 : vector<1x128xf32> to vector<32x128xf32>
    %5 = arith.addf %2, %4 : vector<32x128xf32>
    %cst_5 = arith.constant 0.000000e+00 : f32
    %6 = vector.broadcast %cst_5 : f32 to vector<32x128xf32>
    %7 = arith.maximumf %5, %6 : vector<32x128xf32>
    %c0_6 = arith.constant 0 : index
    %c0_7 = arith.constant 0 : index
    %8 = vector.load %arg4[%c0_6, %c0_7] : memref<128x128xf32, #tpu.memory_space<vmem>>, vector<128x128xf32>
    %cst_8 = arith.constant dense<0.000000e+00> : vector<32x128xf32>
    %9 = tpu.matmul %7, %8, %cst_8 {dimension_numbers = #tpu.dot_dimension_numbers<[1], [0], [0], [1], [0, 0, 1, 1], [], []>} : vector<32x128xf32>, vector<128x128xf32>, vector<32x128xf32> -> vector<32x128xf32>
    %c0_9 = arith.constant 0 : index
    %c0_10 = arith.constant 0 : index
    %10 = vector.load %arg5[%c0_9, %c0_10] : memref<1x128xf32, #tpu.memory_space<vmem>>, vector<1x128xf32>
    %11 = vector.broadcast %10 : vector<1x128xf32> to vector<32x128xf32>
    %12 = arith.addf %9, %11 : vector<32x128xf32>
    %cst_11 = arith.constant 0.000000e+00 : f32
    %13 = vector.broadcast %cst_11 : f32 to vector<32x128xf32>
    %14 = arith.maximumf %12, %13 : vector<32x128xf32>
    %c0_12 = arith.constant 0 : index
    %c0_13 = arith.constant 0 : index
    %15 = vector.load %arg6[%c0_12, %c0_13] : memref<128x128xf32, #tpu.memory_space<vmem>>, vector<128x128xf32>
    %cst_14 = arith.constant dense<0.000000e+00> : vector<32x128xf32>
    %16 = tpu.matmul %14, %15, %cst_14 {dimension_numbers = #tpu.dot_dimension_numbers<[1], [0], [0], [1], [0, 0, 1, 1], [], []>} : vector<32x128xf32>, vector<128x128xf32>, vector<32x128xf32> -> vector<32x128xf32>
    %c0_15 = arith.constant 0 : index
    %c0_16 = arith.constant 0 : index
    %17 = vector.load %arg7[%c0_15, %c0_16] : memref<1x128xf32, #tpu.memory_space<vmem>>, vector<1x128xf32>
    %18 = vector.broadcast %17 : vector<1x128xf32> to vector<32x128xf32>
    %19 = arith.addf %16, %18 : vector<32x128xf32>
    %c0_17 = arith.constant 0 : index
    %c0_18 = arith.constant 0 : index
    %20 = vector.load %arg8[%c0_17, %c0_18] : memref<32x128xf32, #tpu.memory_space<vmem>>, vector<32x128xf32>
    tpu.vector_store %arg8[%c0_17, %c0_18], %19 {strides = array<i32>} : memref<32x128xf32, #tpu.memory_space<vmem>>, vector<32x128xf32>,
    return
  }
  func.func @transform_0(%arg0: i32) -> (i32, i32) {
    %c0_i32 = arith.constant 0 : i32
    %c0_i32_0 = arith.constant 0 : i32
    return %arg0, %c0_i32 : i32, i32
  }
  func.func @transform_1(%arg0: i32) -> (i32, i32) {
    %c0_i32 = arith.constant 0 : i32
    %c0_i32_0 = arith.constant 0 : i32
    %c0_i32_1 = arith.constant 0 : i32
    return %c0_i32, %c0_i32_0 : i32, i32
  }
  func.func @transform_2(%arg0: i32) -> (i32, i32) {
    %c0_i32 = arith.constant 0 : i32
    %c0_i32_0 = arith.constant 0 : i32
    %c0_i32_1 = arith.constant 0 : i32
    return %c0_i32, %c0_i32_0 : i32, i32
  }
  func.func @transform_3(%arg0: i32) -> (i32, i32) {
    %c0_i32 = arith.constant 0 : i32
    %c0_i32_0 = arith.constant 0 : i32
    %c0_i32_1 = arith.constant 0 : i32
    return %c0_i32, %c0_i32_0 : i32, i32
  }
  func.func @transform_4(%arg0: i32) -> (i32, i32) {
    %c0_i32 = arith.constant 0 : i32
    %c0_i32_0 = arith.constant 0 : i32
    %c0_i32_1 = arith.constant 0 : i32
    return %c0_i32, %c0_i32_0 : i32, i32
  }
  func.func @transform_5(%arg0: i32) -> (i32, i32) {
    %c0_i32 = arith.constant 0 : i32
    %c0_i32_0 = arith.constant 0 : i32
    %c0_i32_1 = arith.constant 0 : i32
    return %c0_i32, %c0_i32_0 : i32, i32
  }
  func.func @transform_6(%arg0: i32) -> (i32, i32) {
    %c0_i32 = arith.constant 0 : i32
    %c0_i32_0 = arith.constant 0 : i32
    %c0_i32_1 = arith.constant 0 : i32
    return %c0_i32, %c0_i32_0 : i32, i32
  }
  func.func @transform_7(%arg0: i32) -> (i32, i32) {
    %c0_i32 = arith.constant 0 : i32
    %c0_i32_0 = arith.constant 0 : i32
    return %arg0, %c0_i32 : i32, i32
  }
}

</mosaic_0001>

<llo_original>
// kernel: tpu_custom_call.1
$region0: #{tpu_custom_call.1}
  #allocation0 [shape = 'u32[]', space=smem, size = 0x4, offset = 0x4, fixed_abs, tag = 'smem constant byte address 0x4 - core index']
  #allocation1 [shape = 'u32[144,128]{1,0:T(1,128)}', space=vmem, size = 0x12000, scoped, tag = 'internal scratch']
  %s0 = inlined_call_operand.hbm [shape: f32[64,128], index: 0, kind: input, shape index: {}]
  %s1 = inlined_call_operand.hbm [shape: f32[128,128], index: 1, kind: input, shape index: {}]
  %s2 = inlined_call_operand.vmem [shape: f32[1,128], index: 2, kind: input, shape index: {}]
  %s3 = inlined_call_operand.hbm [shape: f32[128,128], index: 3, kind: input, shape index: {}]
  %s4 = inlined_call_operand.vmem [shape: f32[1,128], index: 4, kind: input, shape index: {}]
  %s5 = inlined_call_operand.hbm [shape: f32[128,128], index: 5, kind: input, shape index: {}]
  %s6 = inlined_call_operand.vmem [shape: f32[1,128], index: 6, kind: input, shape index: {}]
  %s7 = inlined_call_operand.hbm [shape: f32[64,128], index: 7, kind: output, shape index: {}]
  %s8 = sld [smem:[#allocation0]]
  $region77: #{tpu_custom_call.1} parent=0
    _
  %s10 = ssub.s32 1, %s8
  %s11 = scalar_select 0, %s10, %s8
  $region1: #{tpu_custom_call.1} parent=0
    #allocation2 [shape = 'u8[32768]{0}', space=vmem, size = 0x8000, scoped, tag = 'input window, operand 0']
    #allocation3 [shape = 's32[2]{0}', space=sflag, size = 0x8, scoped, tag = 'scoped memory for tpu_custom_call.1']
    #allocation4 [shape = 's32[2]{0}', space=sflag, size = 0x8, scoped, tag = 'scoped memory for tpu_custom_call.1']
    #allocation5 [shape = 'u8[65536]{0}', space=vmem, size = 0x10000, scoped, tag = 'input window, operand 1, single buffered']
    #allocation6 [shape = 's32[1]{0}', space=sflag, size = 0x4, scoped, tag = 'scoped memory for tpu_custom_call.1']
    #allocation7 [shape = 'u8[65536]{0}', space=vmem, size = 0x10000, scoped, tag = 'input window, operand 3, single buffered']
    #allocation8 [shape = 'u8[65536]{0}', space=vmem, size = 0x10000, scoped, tag = 'input window, operand 5, single buffered']
    #allocation9 [shape = 's32[1]{0}', space=sflag, size = 0x4, scoped, tag = 'scoped memory for tpu_custom_call.1']
    #allocation10 [shape = 'u8[32768]{0}', space=vmem, size = 0x8000, scoped, tag = 'output window, operand 0']
    %12 = vsyncpa [#allocation3], 0
    %s13 = scalar_lea.sflag [#allocation3], 1
    %14 = vsyncpa %s13, 0
    %15 = vsyncpa [#allocation6], 0
    %16 = vsyncpa [#allocation9], 0
    %17 = vsyncpa [#allocation4], 0
    %s18 = scalar_lea.sflag [#allocation4], 1
    %19 = vsyncpa %s18, 0
    loop: start=0, step=1, limit=4
    $region2: #{tpu_custom_call.1} parent=1 // loop_pre_header
      _
    $region3: #{tpu_custom_call.1} parent=1 // loop_header
      %s21 = sphi 0, %s25
      %p22 = scmp.ge.s32.totalorder %s21, 4
      %s31 = sphi 0, %s33
      %s34 = sphi 0, %s31
      %s35 = sphi 0, %s34
      %s51 = sphi 0, %s35
      %s55 = sphi 0, %s55
      %s57 = sphi 0, %s55
      %s58 = sphi 0, %s57
      %s72 = sphi 0, %s58
      %s76 = sphi 0, %s76
      %s78 = sphi 0, %s76
      %s79 = sphi 0, %s78
      %s93 = sphi 0, %s79
      %s97 = sphi 0, %s97
      %s99 = sphi 0, %s97
      %s100 = sphi 0, %s99
      %s114 = sphi 0, %s100
      %s118 = sphi 0, %s118
      %s120 = sphi 0, %s118
      %s121 = sphi 0, %s120
      %s135 = sphi 0, %s121
      %s139 = sphi 0, %s139
      %s141 = sphi 0, %s139
      %s142 = sphi 0, %s141
      %s156 = sphi 0, %s142
      %s160 = sphi 0, %s160
      %s162 = sphi 0, %s160
      %s163 = sphi 0, %s162
      %s177 = sphi 0, %s163
      %s183 = sphi 0, %s185
      %s186 = sphi 0, %s183
      %s187 = sphi 0, %s186
      %s203 = sphi 0, %s187
    $region4: #{tpu_custom_call.1} parent=1 // loop_header_branch
      %24 = sbr.rel (%p22) target = $region8
    $region5: #{tpu_custom_call.1} parent=1 // loop_body
      %s26 = ssub.s32 %s21, 1
      %s27 = ssub.s32 %s21, 2
      %s28 = sadd.s32 %s21, 1
      %s29 = ssub.s32 %s21, %s28
      %p30 = scmp.eq.s32.totalorder %s29, 0
      %s32 = sadd.s32 %s31, 1
      %s33 = scalar_select %p30, %s31, %s32
      %p36 = pneg %p30
      %p37 = scmp.eq.s32.totalorder %s21, 1
      %p38 = por %p36, %p37
      %p39 = scmp.ne.s32.totalorder %s31, %s34
      %p40 = scmp.eq.s32.totalorder %s21, 0
      %p41 = por %p39, %p40
      %p42 = scmp.ne.s32.totalorder %s31, %s34
      %p43 = scmp.eq.s32.totalorder %s26, 1
      %p44 = por %p42, %p43
      %p45 = scmp.ne.s32.totalorder %s34, %s35
      %p46 = scmp.eq.s32.totalorder %s26, 0
      %p47 = por %p45, %p46
      %p48 = scmp.ne.s32.totalorder %s34, %s35
      %p49 = scmp.eq.s32.totalorder %s27, 1
      %p50 = por %p48, %p49
      %p52 = scmp.ne.s32.totalorder %s35, %s51
      %p53 = scmp.eq.s32.totalorder %s27, 0
      %p54 = por %p52, %p53
      %s56 = sadd.s32 %s55, 1
      %p59 = scmp.eq.s32.totalorder %s21, 1
      %p60 = scmp.ne.s32.totalorder %s55, %s57
      %p61 = scmp.eq.s32.totalorder %s21, 0
      %p62 = por %p60, %p61
      %p63 = scmp.ne.s32.totalorder %s55, %s57
      %p64 = scmp.eq.s32.totalorder %s26, 1
      %p65 = por %p63, %p64
      %p66 = scmp.ne.s32.totalorder %s57, %s58
      %p67 = scmp.eq.s32.totalorder %s26, 0
      %p68 = por %p66, %p67
      %p69 = scmp.ne.s32.totalorder %s57, %s58
      %p70 = scmp.eq.s32.totalorder %s27, 1
      %p71 = por %p69, %p70
      %p73 = scmp.ne.s32.totalorder %s58, %s72
      %p74 = scmp.eq.s32.totalorder %s27, 0
      %p75 = por %p73, %p74
      %s77 = sadd.s32 %s76, 1
      %p80 = scmp.eq.s32.totalorder %s21, 1
      %p81 = scmp.ne.s32.totalorder %s76, %s78
      %p82 = scmp.eq.s32.totalorder %s21, 0
      %p83 = por %p81, %p82
      %p84 = scmp.ne.s32.totalorder %s76, %s78
      %p85 = scmp.eq.s32.totalorder %s26, 1
      %p86 = por %p84, %p85
      %p87 = scmp.ne.s32.totalorder %s78, %s79
      %p88 = scmp.eq.s32.totalorder %s26, 0
      %p89 = por %p87, %p88
      %p90 = scmp.ne.s32.totalorder %s78, %s79
      %p91 = scmp.eq.s32.totalorder %s27, 1
      %p92 = por %p90, %p91
      %p94 = scmp.ne.s32.totalorder %s79, %s93
      %p95 = scmp.eq.s32.totalorder %s27, 0
      %p96 = por %p94, %p95
      %s98 = sadd.s32 %s97, 1
      %p101 = scmp.eq.s32.totalorder %s21, 1
      %p102 = scmp.ne.s32.totalorder %s97, %s99
      %p103 = scmp.eq.s32.totalorder %s21, 0
      %p104 = por %p102, %p103
      %p105 = scmp.ne.s32.totalorder %s97, %s99
      %p106 = scmp.eq.s32.totalorder %s26, 1
      %p107 = por %p105, %p106
      %p108 = scmp.ne.s32.totalorder %s99, %s100
      %p109 = scmp.eq.s32.totalorder %s26, 0
      %p110 = por %p108, %p109
      %p111 = scmp.ne.s32.totalorder %s99, %s100
      %p112 = scmp.eq.s32.totalorder %s27, 1
      %p113 = por %p111, %p112
      %p115 = scmp.ne.s32.totalorder %s100, %s114
      %p116 = scmp.eq.s32.totalorder %s27, 0
      %p117 = por %p115, %p116
      %s119 = sadd.s32 %s118, 1
      %p122 = scmp.eq.s32.totalorder %s21, 1
      %p123 = scmp.ne.s32.totalorder %s118, %s120
      %p124 = scmp.eq.s32.totalorder %s21, 0
      %p125 = por %p123, %p124
      %p126 = scmp.ne.s32.totalorder %s118, %s120
      %p127 = scmp.eq.s32.totalorder %s26, 1
      %p128 = por %p126, %p127
      %p129 = scmp.ne.s32.totalorder %s120, %s121
      %p130 = scmp.eq.s32.totalorder %s26, 0
      %p131 = por %p129, %p130
      %p132 = scmp.ne.s32.totalorder %s120, %s121
      %p133 = scmp.eq.s32.totalorder %s27, 1
      %p134 = por %p132, %p133
      %p136 = scmp.ne.s32.totalorder %s121, %s135
      %p137 = scmp.eq.s32.totalorder %s27, 0
      %p138 = por %p136, %p137
      %s140 = sadd.s32 %s139, 1
      %p143 = scmp.eq.s32.totalorder %s21, 1
      %p144 = scmp.ne.s32.totalorder %s139, %s141
      %p145 = scmp.eq.s32.totalorder %s21, 0
      %p146 = por %p144, %p145
      %p147 = scmp.ne.s32.totalorder %s139, %s141
      %p148 = scmp.eq.s32.totalorder %s26, 1
      %p149 = por %p147, %p148
      %p150 = scmp.ne.s32.totalorder %s141, %s142
      %p151 = scmp.eq.s32.totalorder %s26, 0
      %p152 = por %p150, %p151
      %p153 = scmp.ne.s32.totalorder %s141, %s142
      %p154 = scmp.eq.s32.totalorder %s27, 1
      %p155 = por %p153, %p154
      %p157 = scmp.ne.s32.totalorder %s142, %s156
      %p158 = scmp.eq.s32.totalorder %s27, 0
      %p159 = por %p157, %p158
      %s161 = sadd.s32 %s160, 1
      %p164 = scmp.eq.s32.totalorder %s21, 1
      %p165 = scmp.ne.s32.totalorder %s160, %s162
      %p166 = scmp.eq.s32.totalorder %s21, 0
      %p167 = por %p165, %p166
      %p168 = scmp.ne.s32.totalorder %s160, %s162
      %p169 = scmp.eq.s32.totalorder %s26, 1
      %p170 = por %p168, %p169
      %p171 = scmp.ne.s32.totalorder %s162, %s163
      %p172 = scmp.eq.s32.totalorder %s26, 0
      %p173 = por %p171, %p172
      %p174 = scmp.ne.s32.totalorder %s162, %s163
      %p175 = scmp.eq.s32.totalorder %s27, 1
      %p176 = por %p174, %p175
      %p178 = scmp.ne.s32.totalorder %s163, %s177
      %p179 = scmp.eq.s32.totalorder %s27, 0
      %p180 = por %p178, %p179
      %s181 = ssub.s32 %s21, %s28
      %p182 = scmp.eq.s32.totalorder %s181, 0
      %s184 = sadd.s32 %s183, 1
      %s185 = scalar_select %p182, %s183, %s184
      %p188 = pneg %p182
      %p189 = scmp.eq.s32.totalorder %s21, 1
      %p190 = por %p188, %p189
      %p191 = scmp.ne.s32.totalorder %s183, %s186
      %p192 = scmp.eq.s32.totalorder %s21, 0
      %p193 = por %p191, %p192
      %p194 = scmp.ne.s32.totalorder %s183, %s186
      %p195 = scmp.eq.s32.totalorder %s26, 1
      %p196 = por %p194, %p195
      %p197 = scmp.ne.s32.totalorder %s186, %s187
      %p198 = scmp.eq.s32.totalorder %s26, 0
      %p199 = por %p197, %p198
      %p200 = scmp.ne.s32.totalorder %s186, %s187
      %p201 = scmp.eq.s32.totalorder %s27, 1
      %p202 = por %p200, %p201
      %p204 = scmp.ne.s32.totalorder %s187, %s203
      %p205 = scmp.eq.s32.totalorder %s27, 0
      %p206 = por %p204, %p205
      %p207 = scmp.le.s32.totalorder 1, %s21
      %p208 = scmp.lt.s32.totalorder %s21, 3
      %p209 = pnand %p207, %p208
      %p210 = pneg %p209
      // Predicated region
      $region9: #{tpu_custom_call.1} parent=5 // pred_check
        _
      $region10: #{tpu_custom_call.1} parent=5 // pred_check_branch
        %212 = sbr.rel (%p209) target = $region12
      $region11: #{tpu_custom_call.1} parent=5 // pred_region
        %s213 = ssub.s32 %s21, 1
        // Predicated region
        $region13: #{tpu_custom_call.1} parent=11 // pred_check
          %p214 = pneg %p68
        $region14: #{tpu_custom_call.1} parent=11 // pred_check_branch
          %216 = sbr.rel (%p214) target = $region16
        $region15: #{tpu_custom_call.1} parent=11 // pred_region
          %s218 = ssub.s32 2048, 2048
          %219 = vsyncadd [#allocation6], %s218
          %s220 = sshll.u32 [#allocation5], 4
          %s221 = int_to_ptr.vmem [resolvable:$true] %s220
          %226 = dma.hbm_to_vmem [thread:$0]  %s1, 2048, %s221, [#allocation6], 128, 128, 8
        $region16: #{tpu_custom_call.1} parent=11 // pred_fallthru
          _
        // Predicated region
        $region17: #{tpu_custom_call.1} parent=11 // pred_check
          %p227 = pneg %p89
        $region18: #{tpu_custom_call.1} parent=11 // pred_check_branch
          %229 = sbr.rel (%p227) target = $region20
        $region19: #{tpu_custom_call.1} parent=11 // pred_region
          _
        $region20: #{tpu_custom_call.1} parent=11 // pred_fallthru
          _
        // Predicated region
        $region21: #{tpu_custom_call.1} parent=11 // pred_check
          %p230 = pneg %p110
        $region22: #{tpu_custom_call.1} parent=11 // pred_check_branch
          %232 = sbr.rel (%p230) target = $region24
        $region23: #{tpu_custom_call.1} parent=11 // pred_region
          %s234 = ssub.s32 2048, 2048
          %235 = vsyncadd [#allocation6], %s234
          %s236 = sshll.u32 [#allocation7], 4
          %s237 = int_to_ptr.vmem [resolvable:$true] %s236
          %242 = dma.hbm_to_vmem [thread:$0]  %s3, 2048, %s237, [#allocation6], 128, 128, 8
        $region24: #{tpu_custom_call.1} parent=11 // pred_fallthru
          _
        // Predicated region
        $region25: #{tpu_custom_call.1} parent=11 // pred_check
          %p243 = pneg %p131
        $region26: #{tpu_custom_call.1} parent=11 // pred_check_branch
          %245 = sbr.rel (%p243) target = $region28
        $region27: #{tpu_custom_call.1} parent=11 // pred_region
          _
        $region28: #{tpu_custom_call.1} parent=11 // pred_fallthru
          _
        // Predicated region
        $region29: #{tpu_custom_call.1} parent=11 // pred_check
          %p246 = pneg %p152
        $region30: #{tpu_custom_call.1} parent=11 // pred_check_branch
          %248 = sbr.rel (%p246) target = $region32
        $region31: #{tpu_custom_call.1} parent=11 // pred_region
          %s250 = ssub.s32 2048, 2048
          %251 = vsyncadd [#allocation9], %s250
          %s252 = sshll.u32 [#allocation8], 4
          %s253 = int_to_ptr.vmem [resolvable:$true] %s252
          %258 = dma.hbm_to_vmem [thread:$0]  %s5, 2048, %s253, [#allocation9], 128, 128, 8
        $region32: #{tpu_custom_call.1} parent=11 // pred_fallthru
          _
        // Predicated region
        $region33: #{tpu_custom_call.1} parent=11 // pred_check
          %p259 = pneg %p173
        $region34: #{tpu_custom_call.1} parent=11 // pred_check_branch
          %261 = sbr.rel (%p259) target = $region36
        $region35: #{tpu_custom_call.1} parent=11 // pred_region
          _
        $region36: #{tpu_custom_call.1} parent=11 // pred_fallthru
          _
      $region12: #{tpu_custom_call.1} parent=5 // pred_fallthru
        _
      %p262 = scmp.lt.s32.totalorder %s21, 2
      // Predicated region
      $region37: #{tpu_custom_call.1} parent=5 // pred_check
        %p263 = pneg %p262
      $region38: #{tpu_custom_call.1} parent=5 // pred_check_branch
        %265 = sbr.rel (%p263) target = $region40
      $region39: #{tpu_custom_call.1} parent=5 // pred_region
        // Predicated region
        $region41: #{tpu_custom_call.1} parent=39 // pred_check
          %p266 = pneg %p41
        $region42: #{tpu_custom_call.1} parent=39 // pred_check_branch
          %268 = sbr.rel (%p266) target = $region44
        $region43: #{tpu_custom_call.1} parent=39 // pred_region
          %s269 = sand.u32 %s31, 1
          %s270 = scalar_lea.sflag [#allocation3], %s269
          %s271 = sand.u32 %s31, 1
          %s272 = smul.addr %s271, 32
          %s273 = scalar_lea.vmem [#allocation2], %s272
          %s274 = smul.u32 4, %s21
          %s276 = ssub.s32 512, 512
          %277 = vsyncadd %s270, %s276
          %s278 = smul.addr %s274, 128
          %s279 = scalar_lea.hbm %s0, %s278
          %s280 = sshll.u32 %s273, 4
          %s281 = int_to_ptr.vmem [resolvable:$true] %s280
          %286 = dma.hbm_to_vmem [thread:$0]  %s279, 512, %s281, %s270, 128, 128, 8
        $region44: #{tpu_custom_call.1} parent=39 // pred_fallthru
          _
      $region40: #{tpu_custom_call.1} parent=5 // pred_fallthru
        _
      %p287 = scmp.le.s32.totalorder 1, %s21
      %p288 = scmp.lt.s32.totalorder %s21, 3
      %p289 = pnand %p287, %p288
      %p290 = pneg %p289
      // Predicated region
      $region45: #{tpu_custom_call.1} parent=5 // pred_check
        _
      $region46: #{tpu_custom_call.1} parent=5 // pred_check_branch
        %292 = sbr.rel (%p289) target = $region48
      $region47: #{tpu_custom_call.1} parent=5 // pred_region
        %s293 = ssub.s32 %s21, 1
        %s294 = sand.u32 %s34, 1
        %s295 = scalar_lea.sflag [#allocation3], %s294
        %s296 = sand.u32 %s34, 1
        %s297 = smul.addr %s296, 32
        %s298 = scalar_lea.vmem [#allocation2], %s297
        // Predicated region
        $region49: #{tpu_custom_call.1} parent=47 // pred_check
          %p299 = pneg %p47
        $region50: #{tpu_custom_call.1} parent=47 // pred_check_branch
          %301 = sbr.rel (%p299) target = $region52
        $region51: #{tpu_custom_call.1} parent=47 // pred_region
          %302 = dma.done %s295, 512
        $region52: #{tpu_custom_call.1} parent=47 // pred_fallthru
          _
        // Predicated region
        $region53: #{tpu_custom_call.1} parent=47 // pred_check
          %p303 = pneg %p68
        $region54: #{tpu_custom_call.1} parent=47 // pred_check_branch
          %305 = sbr.rel (%p303) target = $region56
        $region55: #{tpu_custom_call.1} parent=47 // pred_region
          %306 = dma.done [#allocation6], 2048
        $region56: #{tpu_custom_call.1} parent=47 // pred_fallthru
          _
        // Predicated region
        $region57: #{tpu_custom_call.1} parent=47 // pred_check
          %p307 = pneg %p110
        $region58: #{tpu_custom_call.1} parent=47 // pred_check_branch
          %309 = sbr.rel (%p307) target = $region60
        $region59: #{tpu_custom_call.1} parent=47 // pred_region
          %310 = dma.done [#allocation6], 2048
        $region60: #{tpu_custom_call.1} parent=47 // pred_fallthru
          _
        // Predicated region
        $region61: #{tpu_custom_call.1} parent=47 // pred_check
          %p311 = pneg %p152
        $region62: #{tpu_custom_call.1} parent=47 // pred_check_branch
          %313 = sbr.rel (%p311) target = $region64
        $region63: #{tpu_custom_call.1} parent=47 // pred_region
          %314 = dma.done [#allocation9], 2048
        $region64: #{tpu_custom_call.1} parent=47 // pred_fallthru
          _
        %s315 = sand.u32 %s34, 1
        %s316 = scalar_lea.sflag [#allocation3], %s315
        %s317 = sand.u32 %s34, 1
        %s318 = smul.addr %s317, 32
        %s319 = scalar_lea.vmem [#allocation2], %s318
        %p320 = pneg %p47
        %p321 = pneg %p44
        %p322 = pneg %p68
        %p323 = pneg %p65
        %p324 = pneg %p89
        %p325 = pneg %p86
        %p326 = pneg %p110
        %p327 = pneg %p107
        %p328 = pneg %p131
        %p329 = pneg %p128
        %p330 = pneg %p152
        %p331 = pneg %p149
        %p332 = pneg %p173
        %p333 = pneg %p170
        %p334 = pneg %p199
        %p335 = pneg %p196
        %s336 = sand.u32 %s186, 1
        %s337 = scalar_lea.sflag [#allocation4], %s336
        %s338 = sand.u32 %s186, 1
        %s339 = smul.addr %s338, 32
        %s340 = scalar_lea.vmem [#allocation10], %s339
        %s341 = smul.u32 4, %s26
        %s342 = smul.u32 4, %s26
        %v343 = vld [vmem:[%s298] sm:$0xff]
        %v344 = vld [vmem:[%s298 + $0x8] sm:$0xff]
        %v345 = vld [vmem:[%s298 + $0x10] sm:$0xff]
        %v346 = vld [vmem:[%s298 + $0x18] sm:$0xff]
        %v347 = vld [vmem:[#allocation5] sm:$0xff]
        %v348 = vld [vmem:[#allocation5 + $0x8] sm:$0xff]
        %v349 = vld [vmem:[#allocation5 + $0x10] sm:$0xff]
        %v350 = vld [vmem:[#allocation5 + $0x18] sm:$0xff]
        %v351 = vld [vmem:[#allocation5 + $0x20] sm:$0xff]
        %v352 = vld [vmem:[#allocation5 + $0x28] sm:$0xff]
        %v353 = vld [vmem:[#allocation5 + $0x30] sm:$0xff]
        %v354 = vld [vmem:[#allocation5 + $0x38] sm:$0xff]
        %v355 = vld [vmem:[#allocation5 + $0x40] sm:$0xff]
        %v356 = vld [vmem:[#allocation5 + $0x48] sm:$0xff]
        %v357 = vld [vmem:[#allocation5 + $0x50] sm:$0xff]
        %v358 = vld [vmem:[#allocation5 + $0x58] sm:$0xff]
        %v359 = vld [vmem:[#allocation5 + $0x60] sm:$0xff]
        %v360 = vld [vmem:[#allocation5 + $0x68] sm:$0xff]
        %v361 = vld [vmem:[#allocation5 + $0x70] sm:$0xff]
        %v362 = vld [vmem:[#allocation5 + $0x78] sm:$0xff]
        %v363 = vld [vmem:[%s2] sm:$0x1]
        %v365 = vlaneseq
        %v366 = vshrl.u32 %v365, 7
        %v367 = vsub.s32 0, %v366
        %v368 = vrot.slane %v363, %v367
        %370 = vmatprep.subr.mxu0 0.0
        %371 = vmatpush1.msra.mxu0 %v347
        %372 = vmatprep.subr.mxu0 0.0
        %373 = vmatpush1.msra.mxu0 %v348
        %374 = vmatprep.subr.mxu0 0.0
        %375 = vmatpush1.msra.mxu0 %v349
        %376 = vmatprep.subr.mxu0 0.0
        %377 = vmatpush1.msra.mxu0 %v350
        %378 = vmatprep.subr.mxu0 0.0
        %379 = vmatpush1.msra.mxu0 %v351
        %380 = vmatprep.subr.mxu0 0.0
        %381 = vmatpush1.msra.mxu0 %v352
        %382 = vmatprep.subr.mxu0 0.0
        %383 = vmatpush1.msra.mxu0 %v353
        %384 = vmatprep.subr.mxu0 0.0
        %385 = vmatpush1.msra.mxu0 %v354
        %386 = vmatprep.subr.mxu0 0.0
        %387 = vmatpush1.msra.mxu0 %v355
        %388 = vmatprep.subr.mxu0 0.0
        %389 = vmatpush1.msra.mxu0 %v356
        %390 = vmatprep.subr.mxu0 0.0
        %391 = vmatpush1.msra.mxu0 %v357
        %392 = vmatprep.subr.mxu0 0.0
        %393 = vmatpush1.msra.mxu0 %v358
        %394 = vmatprep.subr.mxu0 0.0
        %395 = vmatpush1.msra.mxu0 %v359
        %396 = vmatprep.subr.mxu0 0.0
        %397 = vmatpush1.msra.mxu0 %v360
        %398 = vmatprep.subr.mxu0 0.0
        %399 = vmatpush1.msra.mxu0 %v361
        %400 = vmatprep.subr.mxu0 0.0
        %401 = vmatpush1.msra.mxu0 %v362
        %402 = vmatprep.subr.mxu0 0.0
        %403 = vmatpush1.msra.mxu0 0.0
        %404 = vmatprep.subr.mxu0 0.0
        %405 = vmatpush1.msra.mxu0 0.0
        %406 = vmatprep.subr.mxu0 0.0
        %407 = vmatpush1.msra.mxu0 0.0
        %408 = vmatprep.subr.mxu0 0.0
        %409 = vmatpush1.msra.mxu0 0.0
        %410 = vmatprep.subr.mxu0 0.0
        %411 = vmatpush1.msra.mxu0 0.0
        %412 = vmatprep.subr.mxu0 0.0
        %413 = vmatpush1.msra.mxu0 0.0
        %414 = vmatprep.subr.mxu0 0.0
        %415 = vmatpush1.msra.mxu0 0.0
        %416 = vmatprep.subr.mxu0 0.0
        %417 = vmatpush1.msra.mxu0 0.0
        %418 = vmatprep.subr.mxu0 0.0
        %419 = vmatpush1.msra.mxu0 0.0
        %420 = vmatprep.subr.mxu0 0.0
        %421 = vmatpush1.msra.mxu0 0.0
        %422 = vmatprep.subr.mxu0 0.0
        %423 = vmatpush1.msra.mxu0 0.0
        %424 = vmatprep.subr.mxu0 0.0
        %425 = vmatpush1.msra.mxu0 0.0
        %426 = vmatprep.subr.mxu0 0.0
        %427 = vmatpush1.msra.mxu0 0.0
        %428 = vmatprep.subr.mxu0 0.0
        %429 = vmatpush1.msra.mxu0 0.0
        %430 = vmatprep.subr.mxu0 0.0
        %431 = vmatpush1.msra.mxu0 0.0
        %432 = vmatprep.subr.mxu0 0.0
        %433 = vmatpush1.msra.mxu0 0.0
        %434 = vmatprep.mubr.f32.mxu0 0.0
        %435 = vmatmul.mubr.f32.gmra.mrb[0].mxu0 %v343
        %v436 = vpop.f32.mrb[0].mxu0
        %v437 = vadd.f32 %v368, %v436
        %v438 = vpop.f32.mrb[0].mxu0
        %439 = vmatprep.mubr.f32.mxu0 0.0
        %440 = vmatmul.mubr.f32.gmra.mrb[0].mxu0 %v344
        %v441 = vpop.f32.mrb[0].mxu0
        %v442 = vadd.f32 %v368, %v441
        %v443 = vpop.f32.mrb[0].mxu0
        %444 = vmatprep.mubr.f32.mxu0 0.0
        %445 = vmatmul.mubr.f32.gmra.mrb[0].mxu0 %v345
        %v446 = vpop.f32.mrb[0].mxu0
        %v447 = vadd.f32 %v368, %v446
        %v448 = vpop.f32.mrb[0].mxu0
        %449 = vmatprep.mubr.f32.mxu0 0.0
        %450 = vmatmul.mubr.f32.gmra.mrb[0].mxu0 %v346
        %v451 = vpop.f32.mrb[0].mxu0
        %v452 = vadd.f32 %v368, %v451
        %v453 = vpop.f32.mrb[0].mxu0
        %454 = vdwg.mxu0
        %v455 = vmax.f32 %v437, 0.0
        %v456 = vmax.f32 %v442, 0.0
        %v457 = vmax.f32 %v447, 0.0
        %v458 = vmax.f32 %v452, 0.0
        %v459 = vld [vmem:[#allocation7] sm:$0xff]
        %v460 = vld [vmem:[#allocation7 + $0x8] sm:$0xff]
        %v461 = vld [vmem:[#allocation7 + $0x10] sm:$0xff]
        %v462 = vld [vmem:[#allocation7 + $0x18] sm:$0xff]
        %v463 = vld [vmem:[#allocation7 + $0x20] sm:$0xff]
        %v464 = vld [vmem:[#allocation7 + $0x28] sm:$0xff]
        %v465 = vld [vmem:[#allocation7 + $0x30] sm:$0xff]
        %v466 = vld [vmem:[#allocation7 + $0x38] sm:$0xff]
        %v467 = vld [vmem:[#allocation7 + $0x40] sm:$0xff]
        %v468 = vld [vmem:[#allocation7 + $0x48] sm:$0xff]
        %v469 = vld [vmem:[#allocation7 + $0x50] sm:$0xff]
        %v470 = vld [vmem:[#allocation7 + $0x58] sm:$0xff]
        %v471 = vld [vmem:[#allocation7 + $0x60] sm:$0xff]
        %v472 = vld [vmem:[#allocation7 + $0x68] sm:$0xff]
        %v473 = vld [vmem:[#allocation7 + $0x70] sm:$0xff]
        %v474 = vld [vmem:[#allocation7 + $0x78] sm:$0xff]
        %v475 = vld [vmem:[%s4] sm:$0x1]
        %v477 = vlaneseq
        %v478 = vshrl.u32 %v477, 7
        %v479 = vsub.s32 0, %v478
        %v480 = vrot.slane %v475, %v479
        %482 = vmatprep.subr.mxu0 0.0
        %483 = vmatpush1.msra.mxu0 %v459
        %484 = vmatprep.subr.mxu0 0.0
        %485 = vmatpush1.msra.mxu0 %v460
        %486 = vmatprep.subr.mxu0 0.0
        %487 = vmatpush1.msra.mxu0 %v461
        %488 = vmatprep.subr.mxu0 0.0
        %489 = vmatpush1.msra.mxu0 %v462
        %490 = vmatprep.subr.mxu0 0.0
        %491 = vmatpush1.msra.mxu0 %v463
        %492 = vmatprep.subr.mxu0 0.0
        %493 = vmatpush1.msra.mxu0 %v464
        %494 = vmatprep.subr.mxu0 0.0
        %495 = vmatpush1.msra.mxu0 %v465
        %496 = vmatprep.subr.mxu0 0.0
        %497 = vmatpush1.msra.mxu0 %v466
        %498 = vmatprep.subr.mxu0 0.0
        %499 = vmatpush1.msra.mxu0 %v467
        %500 = vmatprep.subr.mxu0 0.0
        %501 = vmatpush1.msra.mxu0 %v468
        %502 = vmatprep.subr.mxu0 0.0
        %503 = vmatpush1.msra.mxu0 %v469
        %504 = vmatprep.subr.mxu0 0.0
        %505 = vmatpush1.msra.mxu0 %v470
        %506 = vmatprep.subr.mxu0 0.0
        %507 = vmatpush1.msra.mxu0 %v471
        %508 = vmatprep.subr.mxu0 0.0
        %509 = vmatpush1.msra.mxu0 %v472
        %510 = vmatprep.subr.mxu0 0.0
        %511 = vmatpush1.msra.mxu0 %v473
        %512 = vmatprep.subr.mxu0 0.0
        %513 = vmatpush1.msra.mxu0 %v474
        %514 = vmatprep.subr.mxu0 0.0
        %515 = vmatpush1.msra.mxu0 0.0
        %516 = vmatprep.subr.mxu0 0.0
        %517 = vmatpush1.msra.mxu0 0.0
        %518 = vmatprep.subr.mxu0 0.0
        %519 = vmatpush1.msra.mxu0 0.0
        %520 = vmatprep.subr.mxu0 0.0
        %521 = vmatpush1.msra.mxu0 0.0
        %522 = vmatprep.subr.mxu0 0.0
        %523 = vmatpush1.msra.mxu0 0.0
        %524 = vmatprep.subr.mxu0 0.0
        %525 = vmatpush1.msra.mxu0 0.0
        %526 = vmatprep.subr.mxu0 0.0
        %527 = vmatpush1.msra.mxu0 0.0
        %528 = vmatprep.subr.mxu0 0.0
        %529 = vmatpush1.msra.mxu0 0.0
        %530 = vmatprep.subr.mxu0 0.0
        %531 = vmatpush1.msra.mxu0 0.0
        %532 = vmatprep.subr.mxu0 0.0
        %533 = vmatpush1.msra.mxu0 0.0
        %534 = vmatprep.subr.mxu0 0.0
        %535 = vmatpush1.msra.mxu0 0.0
        %536 = vmatprep.subr.mxu0 0.0
        %537 = vmatpush1.msra.mxu0 0.0
        %538 = vmatprep.subr.mxu0 0.0
        %539 = vmatpush1.msra.mxu0 0.0
        %540 = vmatprep.subr.mxu0 0.0
        %541 = vmatpush1.msra.mxu0 0.0
        %542 = vmatprep.subr.mxu0 0.0
        %543 = vmatpush1.msra.mxu0 0.0
        %544 = vmatprep.subr.mxu0 0.0
        %545 = vmatpush1.msra.mxu0 0.0
        %546 = vmatprep.mubr.f32.mxu0 0.0
        %547 = vmatmul.mubr.f32.gmra.mrb[0].mxu0 %v455
        %v548 = vpop.f32.mrb[0].mxu0
        %v549 = vadd.f32 %v480, %v548
        %v550 = vpop.f32.mrb[0].mxu0
        %551 = vmatprep.mubr.f32.mxu0 0.0
        %552 = vmatmul.mubr.f32.gmra.mrb[0].mxu0 %v456
        %v553 = vpop.f32.mrb[0].mxu0
        %v554 = vadd.f32 %v480, %v553
        %v555 = vpop.f32.mrb[0].mxu0
        %556 = vmatprep.mubr.f32.mxu0 0.0
        %557 = vmatmul.mubr.f32.gmra.mrb[0].mxu0 %v457
        %v558 = vpop.f32.mrb[0].mxu0
        %v559 = vadd.f32 %v480, %v558
        %v560 = vpop.f32.mrb[0].mxu0
        %561 = vmatprep.mubr.f32.mxu0 0.0
        %562 = vmatmul.mubr.f32.gmra.mrb[0].mxu0 %v458
        %v563 = vpop.f32.mrb[0].mxu0
        %v564 = vadd.f32 %v480, %v563
        %v565 = vpop.f32.mrb[0].mxu0
        %566 = vdwg.mxu0
        %v567 = vmax.f32 %v549, 0.0
        %v568 = vmax.f32 %v554, 0.0
        %v569 = vmax.f32 %v559, 0.0
        %v570 = vmax.f32 %v564, 0.0
        %v571 = vld [vmem:[#allocation8] sm:$0xff]
        %v572 = vld [vmem:[#allocation8 + $0x8] sm:$0xff]
        %v573 = vld [vmem:[#allocation8 + $0x10] sm:$0xff]
        %v574 = vld [vmem:[#allocation8 + $0x18] sm:$0xff]
        %v575 = vld [vmem:[#allocation8 + $0x20] sm:$0xff]
        %v576 = vld [vmem:[#allocation8 + $0x28] sm:$0xff]
        %v577 = vld [vmem:[#allocation8 + $0x30] sm:$0xff]
        %v578 = vld [vmem:[#allocation8 + $0x38] sm:$0xff]
        %v579 = vld [vmem:[#allocation8 + $0x40] sm:$0xff]
        %v580 = vld [vmem:[#allocation8 + $0x48] sm:$0xff]
        %v581 = vld [vmem:[#allocation8 + $0x50] sm:$0xff]
        %v582 = vld [vmem:[#allocation8 + $0x58] sm:$0xff]
        %v583 = vld [vmem:[#allocation8 + $0x60] sm:$0xff]
        %v584 = vld [vmem:[#allocation8 + $0x68] sm:$0xff]
        %v585 = vld [vmem:[#allocation8 + $0x70] sm:$0xff]
        %v586 = vld [vmem:[#allocation8 + $0x78] sm:$0xff]
        %v587 = vld [vmem:[%s6] sm:$0x1]
        %v589 = vlaneseq
        %v590 = vshrl.u32 %v589, 7
        %v591 = vsub.s32 0, %v590
        %v592 = vrot.slane %v587, %v591
        %594 = vmatprep.subr.mxu0 0.0
        %595 = vmatpush1.msra.mxu0 %v571
        %596 = vmatprep.subr.mxu0 0.0
        %597 = vmatpush1.msra.mxu0 %v572
        %598 = vmatprep.subr.mxu0 0.0
        %599 = vmatpush1.msra.mxu0 %v573
        %600 = vmatprep.subr.mxu0 0.0
        %601 = vmatpush1.msra.mxu0 %v574
        %602 = vmatprep.subr.mxu0 0.0
        %603 = vmatpush1.msra.mxu0 %v575
        %604 = vmatprep.subr.mxu0 0.0
        %605 = vmatpush1.msra.mxu0 %v576
        %606 = vmatprep.subr.mxu0 0.0
        %607 = vmatpush1.msra.mxu0 %v577
        %608 = vmatprep.subr.mxu0 0.0
        %609 = vmatpush1.msra.mxu0 %v578
        %610 = vmatprep.subr.mxu0 0.0
        %611 = vmatpush1.msra.mxu0 %v579
        %612 = vmatprep.subr.mxu0 0.0
        %613 = vmatpush1.msra.mxu0 %v580
        %614 = vmatprep.subr.mxu0 0.0
        %615 = vmatpush1.msra.mxu0 %v581
        %616 = vmatprep.subr.mxu0 0.0
        %617 = vmatpush1.msra.mxu0 %v582
        %618 = vmatprep.subr.mxu0 0.0
        %619 = vmatpush1.msra.mxu0 %v583
        %620 = vmatprep.subr.mxu0 0.0
        %621 = vmatpush1.msra.mxu0 %v584
        %622 = vmatprep.subr.mxu0 0.0
        %623 = vmatpush1.msra.mxu0 %v585
        %624 = vmatprep.subr.mxu0 0.0
        %625 = vmatpush1.msra.mxu0 %v586
        %626 = vmatprep.subr.mxu0 0.0
        %627 = vmatpush1.msra.mxu0 0.0
        %628 = vmatprep.subr.mxu0 0.0
        %629 = vmatpush1.msra.mxu0 0.0
        %630 = vmatprep.subr.mxu0 0.0
        %631 = vmatpush1.msra.mxu0 0.0
        %632 = vmatprep.subr.mxu0 0.0
        %633 = vmatpush1.msra.mxu0 0.0
        %634 = vmatprep.subr.mxu0 0.0
        %635 = vmatpush1.msra.mxu0 0.0
        %636 = vmatprep.subr.mxu0 0.0
        %637 = vmatpush1.msra.mxu0 0.0
        %638 = vmatprep.subr.mxu0 0.0
        %639 = vmatpush1.msra.mxu0 0.0
        %640 = vmatprep.subr.mxu0 0.0
        %641 = vmatpush1.msra.mxu0 0.0
        %642 = vmatprep.subr.mxu0 0.0
        %643 = vmatpush1.msra.mxu0 0.0
        %644 = vmatprep.subr.mxu0 0.0
        %645 = vmatpush1.msra.mxu0 0.0
        %646 = vmatprep.subr.mxu0 0.0
        %647 = vmatpush1.msra.mxu0 0.0
        %648 = vmatprep.subr.mxu0 0.0
        %649 = vmatpush1.msra.mxu0 0.0
        %650 = vmatprep.subr.mxu0 0.0
        %651 = vmatpush1.msra.mxu0 0.0
        %652 = vmatprep.subr.mxu0 0.0
        %653 = vmatpush1.msra.mxu0 0.0
        %654 = vmatprep.subr.mxu0 0.0
        %655 = vmatpush1.msra.mxu0 0.0
        %656 = vmatprep.subr.mxu0 0.0
        %657 = vmatpush1.msra.mxu0 0.0
        %658 = vmatprep.mubr.f32.mxu0 0.0
        %659 = vmatmul.mubr.f32.gmra.mrb[0].mxu0 %v567
        %v660 = vpop.f32.mrb[0].mxu0
        %v661 = vadd.f32 %v592, %v660
        %v662 = vpop.f32.mrb[0].mxu0
        %663 = vmatprep.mubr.f32.mxu0 0.0
        %664 = vmatmul.mubr.f32.gmra.mrb[0].mxu0 %v568
        %v665 = vpop.f32.mrb[0].mxu0
        %v666 = vadd.f32 %v592, %v665
        %v667 = vpop.f32.mrb[0].mxu0
        %668 = vmatprep.mubr.f32.mxu0 0.0
        %669 = vmatmul.mubr.f32.gmra.mrb[0].mxu0 %v569
        %v670 = vpop.f32.mrb[0].mxu0
        %v671 = vadd.f32 %v592, %v670
        %v672 = vpop.f32.mrb[0].mxu0
        %673 = vmatprep.mubr.f32.mxu0 0.0
        %674 = vmatmul.mubr.f32.gmra.mrb[0].mxu0 %v570
        %v675 = vpop.f32.mrb[0].mxu0
        %v676 = vadd.f32 %v592, %v675
        %v677 = vpop.f32.mrb[0].mxu0
        %678 = vdwg.mxu0
        %679 = vst [vmem:[%s340] sm:$0xff] %v661
        %680 = vst [vmem:[%s340 + $0x8] sm:$0xff] %v666
        %681 = vst [vmem:[%s340 + $0x10] sm:$0xff] %v671
        %682 = vst [vmem:[%s340 + $0x18] sm:$0xff] %v676
        %s683 = sand.u32 %s186, 1
        %s684 = scalar_lea.sflag [#allocation4], %s683
        %s685 = sand.u32 %s186, 1
        %s686 = smul.addr %s685, 32
        %s687 = scalar_lea.vmem [#allocation10], %s686
        // Predicated region
        $region65: #{tpu_custom_call.1} parent=47 // pred_check
          %p688 = pneg %p196
        $region66: #{tpu_custom_call.1} parent=47 // pred_check_branch
          %690 = sbr.rel (%p688) target = $region68
        $region67: #{tpu_custom_call.1} parent=47 // pred_region
          %s691 = smul.u32 4, %s26
          %s693 = ssub.s32 512, 512
          %694 = vsyncadd %s684, %s693
          %s695 = smul.addr %s691, 128
          %s696 = scalar_lea.hbm %s7, %s695
          %s697 = sshll.u32 %s687, 4
          %s698 = int_to_ptr.vmem [resolvable:$true] %s697
          %703 = dma.vmem_to_hbm [thread:$0]  %s698, 512, %s696, %s684, 128, 128, 8
        $region68: #{tpu_custom_call.1} parent=47 // pred_fallthru
          _
      $region48: #{tpu_custom_call.1} parent=5 // pred_fallthru
        _
      %p704 = scmp.le.s32.totalorder 2, %s21
      // Predicated region
      $region69: #{tpu_custom_call.1} parent=5 // pred_check
        %p705 = pneg %p704
      $region70: #{tpu_custom_call.1} parent=5 // pred_check_branch
        %707 = sbr.rel (%p705) target = $region72
      $region71: #{tpu_custom_call.1} parent=5 // pred_region
        %s708 = ssub.s32 %s21, 2
        // Predicated region
        $region73: #{tpu_custom_call.1} parent=71 // pred_check
          %p709 = pneg %p202
        $region74: #{tpu_custom_call.1} parent=71 // pred_check_branch
          %711 = sbr.rel (%p709) target = $region76
        $region75: #{tpu_custom_call.1} parent=71 // pred_region
          %s712 = sand.u32 %s187, 1
          %s713 = scalar_lea.sflag [#allocation4], %s712
          %s714 = sand.u32 %s187, 1
          %s715 = smul.addr %s714, 32
          %s716 = scalar_lea.vmem [#allocation10], %s715
          %717 = dma.done %s713, 512
        $region76: #{tpu_custom_call.1} parent=71 // pred_fallthru
          _
      $region72: #{tpu_custom_call.1} parent=5 // pred_fallthru
        _
    $region6: #{tpu_custom_call.1} parent=1 // loop_footer
      %s25 = sadd.s32 1, %s21
    $region7: #{tpu_custom_call.1} parent=1 // loop_footer_branch
      %20 = sbr.rel target = $region3
    $region8: #{tpu_custom_call.1} parent=1 // loop_exit
      _
    %718 = vsyncpa [#allocation3], 1
    %s719 = scalar_lea.sflag [#allocation3], 1
    %720 = vsyncpa %s719, 1
    %721 = vsyncpa [#allocation6], 1
    %722 = vsyncpa [#allocation9], 1
    %723 = vsyncpa [#allocation4], 1
    %s724 = scalar_lea.sflag [#allocation4], 1
    %725 = vsyncpa %s724, 1

</llo_original>
